<compile_context>
chip_gen: v6e
topology: v6e:2x2x1
jax: 0.10.0
libtpu: 0.0.40
codegen_flags: <defaults>
</compile_context>

<pallas_src>
import functools
import math

import jax
import jax.numpy as jnp
from jax import lax
from jax.experimental import pallas as pl
from jax.experimental.pallas import tpu as pltpu


def _sepconv_kernel(x_ref, dww_ref, pww_ref, b_ref, o_ref,
                    *, K, stride, dilation, tile_h, W_out, matmul_dtype):
    # x_ref  : (tile_h_in, Wp, Cin)    input row tile incl. (K-1)*dilation halo
    # dww_ref: (K*K, Cin)              depthwise tap weights
    # pww_ref: (Cin, Cout_pad)         pointwise weights (lane-padded to 128)
    # b_ref  : (1, Cout_pad)           fused bias: dw_bias @ pw_w + pw_bias
    # o_ref  : (tile_h*W_out, Cout_pad) flattened, lane-dense output tile
    Cin = x_ref.shape[-1]
    dww = dww_ref[...].astype(jnp.float32)          # hoisted: read taps once

    def window(kh, kw):
        h0 = kh * dilation
        w0 = kw * dilation
        if stride == 1:
            # Plain shifted window read straight from the ref (no full-image value).
            w = x_ref[pl.ds(h0, tile_h), pl.ds(w0, W_out), :]
        else:
            # TODO(synk): strided W reads cross (8,128) tiles (XLU relayout); this
            # fallback is correct but not optimal for stride > 1.
            w = lax.slice(
                x_ref[...],
                (h0, w0, 0),
                (h0 + (tile_h - 1) * stride + 1,
                 w0 + (W_out - 1) * stride + 1, Cin),
                (stride, stride, 1),
            )
        return w.astype(jnp.float32)

    # Depthwise conv: per-tap shifted window * per-channel weight (VPU), f32 acc.
    acc = window(0, 0) * dww[0]
    for t in range(1, K * K):
        kh, kw = divmod(t, K)
        acc = acc + window(kh, kw) * dww[t]

    # Pointwise 1x1 conv == one MXU matmul in its native 2D layout.
    # (tile_h, W_out, Cin) -> (tile_h*W_out, Cin): single cheap reshape per tile
    # (near-free when W_out is a multiple of 8).
    lhs = acc.reshape(tile_h * W_out, Cin)
    y = jnp.dot(lhs.astype(matmul_dtype), pww_ref[...].astype(matmul_dtype),
                preferred_element_type=jnp.float32)
    y = y + b_ref[0].astype(jnp.float32)
    o_ref[...] = y.astype(o_ref.dtype)              # lane-dense (…,128k) store


def separable_conv2d(x_nchw, dw_weight, dw_bias, pw_weight, pw_bias,
                     *, stride=1, padding=0, dilation=1,
                     tile_h=None, matmul_dtype=jnp.float32):
    """SeparableConv2D forward. x_nchw: (N, Cin, H, W).

    dw_weight: (Cin, 1, K, K)   depthwise weights (groups=Cin, PyTorch layout)
    dw_bias  : (Cin,)
    pw_weight: (Cout, Cin, 1, 1)
    pw_bias  : (Cout,)
    Returns (N, Cout, H_out, W_out), matching nn.Conv2d(groups=Cin) -> 1x1 Conv2d.
    """
    N, Cin, H, W = x_nchw.shape
    K = dw_weight.shape[-1]
    Cout = pw_weight.shape[0]

    H_out = (H + 2 * padding - dilation * (K - 1) - 1) // stride + 1
    W_out = (W + 2 * padding - dilation * (K - 1) - 1) // stride + 1

    # NCHW -> NHWC and zero-pad spatial dims (padding_mode='zeros').
    x = jnp.transpose(x_nchw, (0, 2, 3, 1))
    x = jnp.pad(x, ((0, 0), (padding, padding), (padding, padding), (0, 0)))
    Hp, Wp = x.shape[1], x.shape[2]

    # --- spatial row tiling with a (K-1)*dilation halo -----------------------
    if tile_h is None:
        # target >= ~512 flattened output rows per tile (good MXU M, amortizes
        # the ~0.35us per-grid-step overhead) while keeping tiles VMEM-friendly.
        tile_h = max(1, 512 // max(W_out, 1))
    tile_h = max(1, min(tile_h, H_out))
    halo = (K - 1) * dilation
    tile_h_in = (tile_h - 1) * stride + halo + 1
    T = -(-H_out // tile_h)                          # ceil-div, python int

    # Materialize the overlapping row tiles once in HBM (duplication ~ halo/tile_h)
    # so the BlockSpec pipeline sees plain non-overlapping blocks: it can prefetch
    # tile t+1 and write back tile t-1 while computing tile t.
    row_start = jnp.arange(T) * (tile_h * stride)
    row_idx = jnp.minimum(row_start[:, None] + jnp.arange(tile_h_in)[None, :], Hp - 1)
    x_tiles = jnp.take(x, row_idx, axis=1)           # (N, T, tile_h_in, Wp, Cin)

    # --- weights: depthwise taps flattened; pointwise lane-padded to 128 ------
    Cout_pad = ((Cout + 127) // 128) * 128
    dww = jnp.transpose(dw_weight[:, 0, :, :], (1, 2, 0)).reshape(K * K, Cin)
    pww = jnp.transpose(pw_weight[:, :, 0, 0], (1, 0))            # (Cin, Cout)
    # fused bias: (dw_out + dw_b) @ pw + pw_b == dw_out @ pw + (dw_b @ pw + pw_b)
    b_fused = dw_bias @ pww + pw_bias                              # (Cout,)
    pww = jnp.pad(pww, ((0, 0), (0, Cout_pad - Cout)))             # (Cin, Cout_pad)
    b_fused = jnp.pad(b_fused, (0, Cout_pad - Cout)).reshape(1, Cout_pad)

    kernel = functools.partial(
        _sepconv_kernel, K=K, stride=stride, dilation=dilation,
        tile_h=tile_h, W_out=W_out, matmul_dtype=matmul_dtype)

    # Explicit VMEM budget from the tile sizes (double-buffered in/out + weights).
    itemsize = jnp.dtype(x_nchw.dtype).itemsize
    in_tile_bytes = tile_h_in * Wp * Cin * itemsize
    out_tile_bytes = tile_h * W_out * Cout_pad * itemsize
    w_bytes = (K * K * Cin + Cin * Cout_pad + Cout_pad) * 4
    vmem_limit = int(max(16 << 20,
                         min(48 << 20,
                             4 * (in_tile_bytes + out_tile_bytes) + w_bytes + (4 << 20))))

    out = pl.pallas_call(
        kernel,
        out_shape=jax.ShapeDtypeStruct((N, T, tile_h * W_out, Cout_pad), x_nchw.dtype),
        grid_spec=pltpu.PrefetchScalarGridSpec(
            num_scalar_prefetch=0,
            grid=(N, T),
            in_specs=[
                pl.BlockSpec((None, None, tile_h_in, Wp, Cin),
                             lambda n, t: (n, t, 0, 0, 0)),
                pl.BlockSpec((K * K, Cin), lambda n, t: (0, 0)),
                pl.BlockSpec((Cin, Cout_pad), lambda n, t: (0, 0)),
                pl.BlockSpec((1, Cout_pad), lambda n, t: (0, 0)),
            ],
            out_specs=pl.BlockSpec((None, None, tile_h * W_out, Cout_pad),
                                   lambda n, t: (n, t, 0, 0)),
        ),
        compiler_params=pltpu.CompilerParams(
            dimension_semantics=("parallel", "parallel"),
            vmem_limit_bytes=vmem_limit,
        ),
    )(x_tiles, dww, pww, b_fused)

    # (N, T, tile_h*W_out, Cout_pad) -> (N, H_out, W_out, Cout) -> NCHW.
    out = out.reshape(N, T * tile_h, W_out, Cout_pad)[:, :H_out, :, :Cout]
    return jnp.transpose(out, (0, 3, 1, 2))


def _init_params(key, in_channels, out_channels, kernel_size):
    """Deterministic init mimicking nn.Conv2d defaults (kaiming-uniform-ish)."""
    k1, k2, k3, k4 = jax.random.split(key, 4)
    fan_dw = kernel_size * kernel_size                      # groups=Cin -> fan_in = K*K
    bd = 1.0 / math.sqrt(fan_dw)
    dw_weight = jax.random.uniform(
        k1, (in_channels, 1, kernel_size, kernel_size), jnp.float32, -bd, bd)
    dw_bias = jax.random.uniform(k2, (in_channels,), jnp.float32, -bd, bd)
    bp = 1.0 / math.sqrt(in_channels)
    pw_weight = jax.random.uniform(
        k3, (out_channels, in_channels, 1, 1), jnp.float32, -bp, bp)
    pw_bias = jax.random.uniform(k4, (out_channels,), jnp.float32, -bp, bp)
    return dw_weight, dw_bias, pw_weight, pw_bias


def _reference(x, dw_weight, dw_bias, pw_weight, pw_bias, *, stride, padding, dilation):
    """Pure-JAX reference (lax.conv_general_dilated) for correctness check."""
    Cin = x.shape[1]
    y = lax.conv_general_dilated(
        x, dw_weight,
        window_strides=(stride, stride),
        padding=((padding, padding), (padding, padding)),
        rhs_dilation=(dilation, dilation),
        dimension_numbers=("NCHW", "OIHW", "NCHW"),
        feature_group_count=Cin,
    ) + dw_bias[None, :, None, None]
    z = lax.conv_general_dilated(
        y, pw_weight,
        window_strides=(1, 1),
        padding=((0, 0), (0, 0)),
        dimension_numbers=("NCHW", "OIHW", "NCHW"),
    ) + pw_bias[None, :, None, None]
    return z


if __name__ == "__main__":
    # SeparableConv2D(4, 8, kernel_size=3, stride=1, padding=1) on (2, 4, 16, 16).
    N, Cin, H, W = 2, 4, 16, 16
    Cout, K = 8, 3
    stride, padding, dilation = 1, 1, 1

    key = jax.random.PRNGKey(0)
    kx, kp = jax.random.split(key)
    x = jax.random.normal(kx, (N, Cin, H, W), jnp.float32)
    dw_weight, dw_bias, pw_weight, pw_bias = _init_params(kp, Cin, Cout, K)

    ref = _reference(x, dw_weight, dw_bias, pw_weight, pw_bias,
                     stride=stride, padding=padding, dilation=dilation)

    # Exact-semantics (f32 MXU) path; tile_h=8 -> grid (2, 2) exercises row tiling.
    out = separable_conv2d(x, dw_weight, dw_bias, pw_weight, pw_bias,
                           stride=stride, padding=padding, dilation=dilation,
                           tile_h=8)
    out = jax.block_until_ready(out)
    assert out.shape == ref.shape, (out.shape, ref.shape)
    assert jnp.max(jnp.abs(out - ref)) < 1e-4

    # Optional bf16-operand MXU path (higher MXU rate on v6e/v7x); looser tolerance.
    out_bf16 = separable_conv2d(x, dw_weight, dw_bias, pw_weight, pw_bias,
                                stride=stride, padding=padding, dilation=dilation,
                                tile_h=8, matmul_dtype=jnp.bfloat16)
    out_bf16 = jax.block_until_ready(out_bf16)
    assert jnp.max(jnp.abs(out_bf16 - ref)) < 1e-1

    print("KERNEL_OK")
</pallas_src>

<mosaic_0001>
module attributes {stable_mosaic.version = 11 : i64} {
  func.func @_sepconv_kernel(%arg0: i32, %arg1: i32, %arg2: memref<1x1x10x18x4xf32, #tpu.memory_space<vmem>>, %arg3: memref<9x4xf32, #tpu.memory_space<vmem>>, %arg4: memref<4x128xf32, #tpu.memory_space<vmem>>, %arg5: memref<1x128xf32, #tpu.memory_space<vmem>>, %arg6: memref<1x1x128x128xf32, #tpu.memory_space<vmem>>) attributes {dimension_semantics = [#tpu.dimension_semantics<parallel>, #tpu.dimension_semantics<parallel>], iteration_bounds = array<i64: 2, 2>, scalar_prefetch = 0 : i64, scratch_operands = 0 : i64, tpu.core_type = #tpu.core_type<tc>, window_params = [{transform_indices = @transform_0, window_bounds = array<i64: 1, 1, 10, 18, 4>}, {pipeline_mode = #tpu.pipeline_mode<synchronous>, transform_indices = @transform_1, window_bounds = array<i64: 9, 4>}, {pipeline_mode = #tpu.pipeline_mode<synchronous>, transform_indices = @transform_2, window_bounds = array<i64: 4, 128>}, {pipeline_mode = #tpu.pipeline_mode<synchronous>, transform_indices = @transform_3, window_bounds = array<i64: 1, 128>}, {transform_indices = @transform_4, window_bounds = array<i64: 1, 1, 128, 128>}]} {
    %c0 = arith.constant 0 : index
    %c0_0 = arith.constant 0 : index
    %0 = vector.load %arg3[%c0, %c0_0] : memref<9x4xf32, #tpu.memory_space<vmem>>, vector<9x4xf32>
    %c0_1 = arith.constant 0 : index
    %c0_2 = arith.constant 0 : index
    %c0_3 = arith.constant 0 : index
    %c0_4 = arith.constant 0 : index
    %c0_5 = arith.constant 0 : index
    %1 = vector.load %arg2[%c0_1, %c0_2, %c0_3, %c0_4, %c0_5] : memref<1x1x10x18x4xf32, #tpu.memory_space<vmem>>, vector<1x1x8x16x4xf32>
    %2 = vector.shape_cast %1 : vector<1x1x8x16x4xf32> to vector<8x16x4xf32>
    %3 = vector.extract_strided_slice %0 {offsets = [0, 0], sizes = [1, 4], strides = [1, 1]} : vector<9x4xf32> to vector<1x4xf32>
    %4 = vector.shape_cast %3 : vector<1x4xf32> to vector<4xf32>
    %5 = vector.shape_cast %4 : vector<4xf32> to vector<1x1x4xf32>
    %6 = vector.broadcast %5 : vector<1x1x4xf32> to vector<8x16x4xf32>
    %7 = arith.mulf %2, %6 : vector<8x16x4xf32>
    %c0_6 = arith.constant 0 : index
    %c0_7 = arith.constant 0 : index
    %c0_8 = arith.constant 0 : index
    %c1 = arith.constant 1 : index
    %c0_9 = arith.constant 0 : index
    %8 = vector.load %arg2[%c0_6, %c0_7, %c0_8, %c1, %c0_9] : memref<1x1x10x18x4xf32, #tpu.memory_space<vmem>>, vector<1x1x8x16x4xf32>
    %9 = vector.shape_cast %8 : vector<1x1x8x16x4xf32> to vector<8x16x4xf32>
    %10 = vector.extract_strided_slice %0 {offsets = [1, 0], sizes = [1, 4], strides = [1, 1]} : vector<9x4xf32> to vector<1x4xf32>
    %11 = vector.shape_cast %10 : vector<1x4xf32> to vector<4xf32>
    %12 = vector.shape_cast %11 : vector<4xf32> to vector<1x1x4xf32>
    %13 = vector.broadcast %12 : vector<1x1x4xf32> to vector<8x16x4xf32>
    %14 = arith.mulf %9, %13 : vector<8x16x4xf32>
    %15 = arith.addf %7, %14 : vector<8x16x4xf32>
    %c0_10 = arith.constant 0 : index
    %c0_11 = arith.constant 0 : index
    %c0_12 = arith.constant 0 : index
    %c2 = arith.constant 2 : index
    %c0_13 = arith.constant 0 : index
    %16 = vector.load %arg2[%c0_10, %c0_11, %c0_12, %c2, %c0_13] : memref<1x1x10x18x4xf32, #tpu.memory_space<vmem>>, vector<1x1x8x16x4xf32>
    %17 = vector.shape_cast %16 : vector<1x1x8x16x4xf32> to vector<8x16x4xf32>
    %18 = vector.extract_strided_slice %0 {offsets = [2, 0], sizes = [1, 4], strides = [1, 1]} : vector<9x4xf32> to vector<1x4xf32>
    %19 = vector.shape_cast %18 : vector<1x4xf32> to vector<4xf32>
    %20 = vector.shape_cast %19 : vector<4xf32> to vector<1x1x4xf32>
    %21 = vector.broadcast %20 : vector<1x1x4xf32> to vector<8x16x4xf32>
    %22 = arith.mulf %17, %21 : vector<8x16x4xf32>
    %23 = arith.addf %15, %22 : vector<8x16x4xf32>
    %c0_14 = arith.constant 0 : index
    %c0_15 = arith.constant 0 : index
    %c1_16 = arith.constant 1 : index
    %c0_17 = arith.constant 0 : index
    %c0_18 = arith.constant 0 : index
    %24 = vector.load %arg2[%c0_14, %c0_15, %c1_16, %c0_17, %c0_18] : memref<1x1x10x18x4xf32, #tpu.memory_space<vmem>>, vector<1x1x8x16x4xf32>
    %25 = vector.shape_cast %24 : vector<1x1x8x16x4xf32> to vector<8x16x4xf32>
    %26 = vector.extract_strided_slice %0 {offsets = [3, 0], sizes = [1, 4], strides = [1, 1]} : vector<9x4xf32> to vector<1x4xf32>
    %27 = vector.shape_cast %26 : vector<1x4xf32> to vector<4xf32>
    %28 = vector.shape_cast %27 : vector<4xf32> to vector<1x1x4xf32>
    %29 = vector.broadcast %28 : vector<1x1x4xf32> to vector<8x16x4xf32>
    %30 = arith.mulf %25, %29 : vector<8x16x4xf32>
    %31 = arith.addf %23, %30 : vector<8x16x4xf32>
    %c0_19 = arith.constant 0 : index
    %c0_20 = arith.constant 0 : index
    %c1_21 = arith.constant 1 : index
    %c1_22 = arith.constant 1 : index
    %c0_23 = arith.constant 0 : index
    %32 = vector.load %arg2[%c0_19, %c0_20, %c1_21, %c1_22, %c0_23] : memref<1x1x10x18x4xf32, #tpu.memory_space<vmem>>, vector<1x1x8x16x4xf32>
    %33 = vector.shape_cast %32 : vector<1x1x8x16x4xf32> to vector<8x16x4xf32>
    %34 = vector.extract_strided_slice %0 {offsets = [4, 0], sizes = [1, 4], strides = [1, 1]} : vector<9x4xf32> to vector<1x4xf32>
    %35 = vector.shape_cast %34 : vector<1x4xf32> to vector<4xf32>
    %36 = vector.shape_cast %35 : vector<4xf32> to vector<1x1x4xf32>
    %37 = vector.broadcast %36 : vector<1x1x4xf32> to vector<8x16x4xf32>
    %38 = arith.mulf %33, %37 : vector<8x16x4xf32>
    %39 = arith.addf %31, %38 : vector<8x16x4xf32>
    %c0_24 = arith.constant 0 : index
    %c0_25 = arith.constant 0 : index
    %c1_26 = arith.constant 1 : index
    %c2_27 = arith.constant 2 : index
    %c0_28 = arith.constant 0 : index
    %40 = vector.load %arg2[%c0_24, %c0_25, %c1_26, %c2_27, %c0_28] : memref<1x1x10x18x4xf32, #tpu.memory_space<vmem>>, vector<1x1x8x16x4xf32>
    %41 = vector.shape_cast %40 : vector<1x1x8x16x4xf32> to vector<8x16x4xf32>
    %42 = vector.extract_strided_slice %0 {offsets = [5, 0], sizes = [1, 4], strides = [1, 1]} : vector<9x4xf32> to vector<1x4xf32>
    %43 = vector.shape_cast %42 : vector<1x4xf32> to vector<4xf32>
    %44 = vector.shape_cast %43 : vector<4xf32> to vector<1x1x4xf32>
    %45 = vector.broadcast %44 : vector<1x1x4xf32> to vector<8x16x4xf32>
    %46 = arith.mulf %41, %45 : vector<8x16x4xf32>
    %47 = arith.addf %39, %46 : vector<8x16x4xf32>
    %c0_29 = arith.constant 0 : index
    %c0_30 = arith.constant 0 : index
    %c2_31 = arith.constant 2 : index
    %c0_32 = arith.constant 0 : index
    %c0_33 = arith.constant 0 : index
    %48 = vector.load %arg2[%c0_29, %c0_30, %c2_31, %c0_32, %c0_33] : memref<1x1x10x18x4xf32, #tpu.memory_space<vmem>>, vector<1x1x8x16x4xf32>
    %49 = vector.shape_cast %48 : vector<1x1x8x16x4xf32> to vector<8x16x4xf32>
    %50 = vector.extract_strided_slice %0 {offsets = [6, 0], sizes = [1, 4], strides = [1, 1]} : vector<9x4xf32> to vector<1x4xf32>
    %51 = vector.shape_cast %50 : vector<1x4xf32> to vector<4xf32>
    %52 = vector.shape_cast %51 : vector<4xf32> to vector<1x1x4xf32>
    %53 = vector.broadcast %52 : vector<1x1x4xf32> to vector<8x16x4xf32>
    %54 = arith.mulf %49, %53 : vector<8x16x4xf32>
    %55 = arith.addf %47, %54 : vector<8x16x4xf32>
    %c0_34 = arith.constant 0 : index
    %c0_35 = arith.constant 0 : index
    %c2_36 = arith.constant 2 : index
    %c1_37 = arith.constant 1 : index
    %c0_38 = arith.constant 0 : index
    %56 = vector.load %arg2[%c0_34, %c0_35, %c2_36, %c1_37, %c0_38] : memref<1x1x10x18x4xf32, #tpu.memory_space<vmem>>, vector<1x1x8x16x4xf32>
    %57 = vector.shape_cast %56 : vector<1x1x8x16x4xf32> to vector<8x16x4xf32>
    %58 = vector.extract_strided_slice %0 {offsets = [7, 0], sizes = [1, 4], strides = [1, 1]} : vector<9x4xf32> to vector<1x4xf32>
    %59 = vector.shape_cast %58 : vector<1x4xf32> to vector<4xf32>
    %60 = vector.shape_cast %59 : vector<4xf32> to vector<1x1x4xf32>
    %61 = vector.broadcast %60 : vector<1x1x4xf32> to vector<8x16x4xf32>
    %62 = arith.mulf %57, %61 : vector<8x16x4xf32>
    %63 = arith.addf %55, %62 : vector<8x16x4xf32>
    %c0_39 = arith.constant 0 : index
    %c0_40 = arith.constant 0 : index
    %c2_41 = arith.constant 2 : index
    %c2_42 = arith.constant 2 : index
    %c0_43 = arith.constant 0 : index
    %64 = vector.load %arg2[%c0_39, %c0_40, %c2_41, %c2_42, %c0_43] : memref<1x1x10x18x4xf32, #tpu.memory_space<vmem>>, vector<1x1x8x16x4xf32>
    %65 = vector.shape_cast %64 : vector<1x1x8x16x4xf32> to vector<8x16x4xf32>
    %66 = vector.extract_strided_slice %0 {offsets = [8, 0], sizes = [1, 4], strides = [1, 1]} : vector<9x4xf32> to vector<1x4xf32>
    %67 = vector.shape_cast %66 : vector<1x4xf32> to vector<4xf32>
    %68 = vector.shape_cast %67 : vector<4xf32> to vector<1x1x4xf32>
    %69 = vector.broadcast %68 : vector<1x1x4xf32> to vector<8x16x4xf32>
    %70 = arith.mulf %65, %69 : vector<8x16x4xf32>
    %71 = arith.addf %63, %70 : vector<8x16x4xf32>
    %72 = vector.shape_cast %71 : vector<8x16x4xf32> to vector<128x4xf32>
    %c0_44 = arith.constant 0 : index
    %c0_45 = arith.constant 0 : index
    %73 = vector.load %arg4[%c0_44, %c0_45] : memref<4x128xf32, #tpu.memory_space<vmem>>, vector<4x128xf32>
    %cst = arith.constant dense<0.000000e+00> : vector<128x128xf32>
    %74 = tpu.matmul %72, %73, %cst {dimension_numbers = #tpu.dot_dimension_numbers<[1], [0], [0], [1], [0, 0, 1, 1], [], []>} : vector<128x4xf32>, vector<4x128xf32>, vector<128x128xf32> -> vector<128x128xf32>
    %c0_46 = arith.constant 0 : index
    %c0_47 = arith.constant 0 : index
    %75 = vector.load %arg5[%c0_46, %c0_47] : memref<1x128xf32, #tpu.memory_space<vmem>>, vector<1x128xf32>
    %76 = vector.shape_cast %75 : vector<1x128xf32> to vector<128xf32>
    %77 = vector.shape_cast %76 : vector<128xf32> to vector<1x128xf32>
    %78 = vector.broadcast %77 : vector<1x128xf32> to vector<128x128xf32>
    %79 = arith.addf %74, %78 : vector<128x128xf32>
    %c0_48 = arith.constant 0 : index
    %c0_49 = arith.constant 0 : index
    %c0_50 = arith.constant 0 : index
    %c0_51 = arith.constant 0 : index
    %80 = vector.load %arg6[%c0_48, %c0_49, %c0_50, %c0_51] : memref<1x1x128x128xf32, #tpu.memory_space<vmem>>, vector<1x1x128x128xf32>
    %81 = vector.shape_cast %80 : vector<1x1x128x128xf32> to vector<128x128xf32>
    %82 = vector.shape_cast %79 : vector<128x128xf32> to vector<1x1x128x128xf32>
    tpu.vector_store %arg6[%c0_48, %c0_49, %c0_50, %c0_51], %82 {strides = array<i32>} : memref<1x1x128x128xf32, #tpu.memory_space<vmem>>, vector<1x1x128x128xf32>,
    return
  }
  func.func @transform_0(%arg0: i32, %arg1: i32) -> (i32, i32, i32, i32, i32) {
    %c0_i32 = arith.constant 0 : i32
    %c0_i32_0 = arith.constant 0 : i32
    %c0_i32_1 = arith.constant 0 : i32
    %c0_i32_2 = arith.constant 0 : i32
    return %arg0, %arg1, %c0_i32, %c0_i32_0, %c0_i32_1 : i32, i32, i32, i32, i32
  }
  func.func @transform_1(%arg0: i32, %arg1: i32) -> (i32, i32) {
    %c0_i32 = arith.constant 0 : i32
    %c0_i32_0 = arith.constant 0 : i32
    %c0_i32_1 = arith.constant 0 : i32
    return %c0_i32, %c0_i32_0 : i32, i32
  }
  func.func @transform_2(%arg0: i32, %arg1: i32) -> (i32, i32) {
    %c0_i32 = arith.constant 0 : i32
    %c0_i32_0 = arith.constant 0 : i32
    %c0_i32_1 = arith.constant 0 : i32
    return %c0_i32, %c0_i32_0 : i32, i32
  }
  func.func @transform_3(%arg0: i32, %arg1: i32) -> (i32, i32) {
    %c0_i32 = arith.constant 0 : i32
    %c0_i32_0 = arith.constant 0 : i32
    %c0_i32_1 = arith.constant 0 : i32
    return %c0_i32, %c0_i32_0 : i32, i32
  }
  func.func @transform_4(%arg0: i32, %arg1: i32) -> (i32, i32, i32, i32) {
    %c0_i32 = arith.constant 0 : i32
    %c0_i32_0 = arith.constant 0 : i32
    %c0_i32_1 = arith.constant 0 : i32
    return %arg0, %arg1, %c0_i32, %c0_i32_0 : i32, i32, i32, i32
  }
}

</mosaic_0001>

<llo_original>
// kernel: tpu_custom_call.1
$region0: #{tpu_custom_call.1}
  #allocation0 [shape = 'u32[]', space=smem, size = 0x4, offset = 0x4, fixed_abs, tag = 'smem constant byte address 0x4 - core index']
  #allocation1 [shape = 'u32[144,128]{1,0:T(1,128)}', space=vmem, size = 0x12000, scoped, tag = 'internal scratch']
  %s0 = inlined_call_operand.vmem [shape: f32[2,2,10,18,4], index: 0, kind: input, shape index: {}]
  %s1 = inlined_call_operand.vmem [shape: f32[9,4], index: 1, kind: input, shape index: {}]
  %s2 = inlined_call_operand.vmem [shape: f32[4,128], index: 2, kind: input, shape index: {}]
  %s3 = inlined_call_operand.vmem [shape: f32[1,128], index: 3, kind: input, shape index: {}]
  %s4 = inlined_call_operand.hbm [shape: f32[2,2,128,128], index: 4, kind: output, shape index: {}]
  %s5 = sld [smem:[#allocation0]]
  $region49: #{tpu_custom_call.1} parent=0
    _
  %s7 = ssub.s32 1, %s5
  %s8 = scalar_select 0, %s7, %s5
  $region1: #{tpu_custom_call.1} parent=0
    #allocation2 [shape = 'u8[131072]{0}', space=vmem, size = 0x20000, scoped, tag = 'output window, operand 0']
    #allocation3 [shape = 's32[2]{0}', space=sflag, size = 0x8, scoped, tag = 'scoped memory for tpu_custom_call.1']
    %9 = vsyncpa [#allocation3], 0
    %s10 = scalar_lea.sflag [#allocation3], 1
    %11 = vsyncpa %s10, 0
    loop: start=0, step=1, limit=6
    $region2: #{tpu_custom_call.1} parent=1 // loop_pre_header
      _
    $region3: #{tpu_custom_call.1} parent=1 // loop_header
      %s13 = sphi 0, %s17
      %p14 = scmp.ge.s32.totalorder %s13, 6
      %s20 = sphi 0, %s32
      %s21 = sphi 0, %s28
      %s22 = sphi 0, %s20
      %s23 = sphi 0, %s21
      %s24 = sphi 0, %s22
      %s25 = sphi 0, %s23
      %s37 = sphi 0, %s39
      %s40 = sphi 0, %s37
      %s41 = sphi 0, %s40
      %s57 = sphi 0, %s41
      %s61 = sphi 0, %s61
      %s63 = sphi 0, %s61
      %s64 = sphi 0, %s63
      %s78 = sphi 0, %s64
      %s82 = sphi 0, %s82
      %s84 = sphi 0, %s82
      %s85 = sphi 0, %s84
      %s99 = sphi 0, %s85
      %s103 = sphi 0, %s103
      %s105 = sphi 0, %s103
      %s106 = sphi 0, %s105
      %s120 = sphi 0, %s106
      %s128 = sphi 0, %s130
      %s131 = sphi 0, %s128
      %s132 = sphi 0, %s131
      %s148 = sphi 0, %s132
    $region4: #{tpu_custom_call.1} parent=1 // loop_header_branch
      %16 = sbr.rel (%p14) target = $region8
    $region5: #{tpu_custom_call.1} parent=1 // loop_body
      %s18 = ssub.s32 %s13, 1
      %s19 = ssub.s32 %s13, 2
      %s26 = sadd.s32 1, %s21
      %p27 = scmp.ge.s32.totalorder %s26, 2
      %s28 = scalar_select %p27, 0, %s26
      %s29 = sadd.s32 1, %s20
      %s30 = scalar_select %p27, %s29, %s20
      %p31 = scmp.ge.s32.totalorder %s30, 2
      %s32 = scalar_select %p31, 0, %s30
      %s33 = ssub.s32 %s20, %s32
      %s34 = ssub.s32 %s21, %s28
      %s35 = sor.u32 %s33, %s34
      %p36 = scmp.eq.s32.totalorder %s35, 0
      %s38 = sadd.s32 %s37, 1
      %s39 = scalar_select %p36, %s37, %s38
      %p42 = pneg %p36
      %p43 = scmp.eq.s32.totalorder %s13, 3
      %p44 = por %p42, %p43
      %p45 = scmp.ne.s32.totalorder %s37, %s40
      %p46 = scmp.eq.s32.totalorder %s13, 0
      %p47 = por %p45, %p46
      %p48 = scmp.ne.s32.totalorder %s37, %s40
      %p49 = scmp.eq.s32.totalorder %s18, 3
      %p50 = por %p48, %p49
      %p51 = scmp.ne.s32.totalorder %s40, %s41
      %p52 = scmp.eq.s32.totalorder %s18, 0
      %p53 = por %p51, %p52
      %p54 = scmp.ne.s32.totalorder %s40, %s41
      %p55 = scmp.eq.s32.totalorder %s19, 3
      %p56 = por %p54, %p55
      %p58 = scmp.ne.s32.totalorder %s41, %s57
      %p59 = scmp.eq.s32.totalorder %s19, 0
      %p60 = por %p58, %p59
      %s62 = sadd.s32 %s61, 1
      %p65 = scmp.eq.s32.totalorder %s13, 3
      %p66 = scmp.ne.s32.totalorder %s61, %s63
      %p67 = scmp.eq.s32.totalorder %s13, 0
      %p68 = por %p66, %p67
      %p69 = scmp.ne.s32.totalorder %s61, %s63
      %p70 = scmp.eq.s32.totalorder %s18, 3
      %p71 = por %p69, %p70
      %p72 = scmp.ne.s32.totalorder %s63, %s64
      %p73 = scmp.eq.s32.totalorder %s18, 0
      %p74 = por %p72, %p73
      %p75 = scmp.ne.s32.totalorder %s63, %s64
      %p76 = scmp.eq.s32.totalorder %s19, 3
      %p77 = por %p75, %p76
      %p79 = scmp.ne.s32.totalorder %s64, %s78
      %p80 = scmp.eq.s32.totalorder %s19, 0
      %p81 = por %p79, %p80
      %s83 = sadd.s32 %s82, 1
      %p86 = scmp.eq.s32.totalorder %s13, 3
      %p87 = scmp.ne.s32.totalorder %s82, %s84
      %p88 = scmp.eq.s32.totalorder %s13, 0
      %p89 = por %p87, %p88
      %p90 = scmp.ne.s32.totalorder %s82, %s84
      %p91 = scmp.eq.s32.totalorder %s18, 3
      %p92 = por %p90, %p91
      %p93 = scmp.ne.s32.totalorder %s84, %s85
      %p94 = scmp.eq.s32.totalorder %s18, 0
      %p95 = por %p93, %p94
      %p96 = scmp.ne.s32.totalorder %s84, %s85
      %p97 = scmp.eq.s32.totalorder %s19, 3
      %p98 = por %p96, %p97
      %p100 = scmp.ne.s32.totalorder %s85, %s99
      %p101 = scmp.eq.s32.totalorder %s19, 0
      %p102 = por %p100, %p101
      %s104 = sadd.s32 %s103, 1
      %p107 = scmp.eq.s32.totalorder %s13, 3
      %p108 = scmp.ne.s32.totalorder %s103, %s105
      %p109 = scmp.eq.s32.totalorder %s13, 0
      %p110 = por %p108, %p109
      %p111 = scmp.ne.s32.totalorder %s103, %s105
      %p112 = scmp.eq.s32.totalorder %s18, 3
      %p113 = por %p111, %p112
      %p114 = scmp.ne.s32.totalorder %s105, %s106
      %p115 = scmp.eq.s32.totalorder %s18, 0
      %p116 = por %p114, %p115
      %p117 = scmp.ne.s32.totalorder %s105, %s106
      %p118 = scmp.eq.s32.totalorder %s19, 3
      %p119 = por %p117, %p118
      %p121 = scmp.ne.s32.totalorder %s106, %s120
      %p122 = scmp.eq.s32.totalorder %s19, 0
      %p123 = por %p121, %p122
      %s124 = ssub.s32 %s20, %s32
      %s125 = ssub.s32 %s21, %s28
      %s126 = sor.u32 %s124, %s125
      %p127 = scmp.eq.s32.totalorder %s126, 0
      %s129 = sadd.s32 %s128, 1
      %s130 = scalar_select %p127, %s128, %s129
      %p133 = pneg %p127
      %p134 = scmp.eq.s32.totalorder %s13, 3
      %p135 = por %p133, %p134
      %p136 = scmp.ne.s32.totalorder %s128, %s131
      %p137 = scmp.eq.s32.totalorder %s13, 0
      %p138 = por %p136, %p137
      %p139 = scmp.ne.s32.totalorder %s128, %s131
      %p140 = scmp.eq.s32.totalorder %s18, 3
      %p141 = por %p139, %p140
      %p142 = scmp.ne.s32.totalorder %s131, %s132
      %p143 = scmp.eq.s32.totalorder %s18, 0
      %p144 = por %p142, %p143
      %p145 = scmp.ne.s32.totalorder %s131, %s132
      %p146 = scmp.eq.s32.totalorder %s19, 3
      %p147 = por %p145, %p146
      %p149 = scmp.ne.s32.totalorder %s132, %s148
      %p150 = scmp.eq.s32.totalorder %s19, 0
      %p151 = por %p149, %p150
      %p152 = scmp.le.s32.totalorder 1, %s13
      %p153 = scmp.lt.s32.totalorder %s13, 5
      %p154 = pnand %p152, %p153
      %p155 = pneg %p154
      // Predicated region
      $region9: #{tpu_custom_call.1} parent=5 // pred_check
        _
      $region10: #{tpu_custom_call.1} parent=5 // pred_check_branch
        %157 = sbr.rel (%p154) target = $region12
      $region11: #{tpu_custom_call.1} parent=5 // pred_region
        %s158 = ssub.s32 %s13, 1
        // Predicated region
        $region13: #{tpu_custom_call.1} parent=11 // pred_check
          %p159 = pneg %p74
        $region14: #{tpu_custom_call.1} parent=11 // pred_check_branch
          %161 = sbr.rel (%p159) target = $region16
        $region15: #{tpu_custom_call.1} parent=11 // pred_region
          _
        $region16: #{tpu_custom_call.1} parent=11 // pred_fallthru
          _
        // Predicated region
        $region17: #{tpu_custom_call.1} parent=11 // pred_check
          %p162 = pneg %p95
        $region18: #{tpu_custom_call.1} parent=11 // pred_check_branch
          %164 = sbr.rel (%p162) target = $region20
        $region19: #{tpu_custom_call.1} parent=11 // pred_region
          _
        $region20: #{tpu_custom_call.1} parent=11 // pred_fallthru
          _
        // Predicated region
        $region21: #{tpu_custom_call.1} parent=11 // pred_check
          %p165 = pneg %p116
        $region22: #{tpu_custom_call.1} parent=11 // pred_check_branch
          %167 = sbr.rel (%p165) target = $region24
        $region23: #{tpu_custom_call.1} parent=11 // pred_region
          _
        $region24: #{tpu_custom_call.1} parent=11 // pred_fallthru
          _
      $region12: #{tpu_custom_call.1} parent=5 // pred_fallthru
        _
      %p168 = scmp.lt.s32.totalorder %s13, 4
      // Predicated region
      $region25: #{tpu_custom_call.1} parent=5 // pred_check
        %p169 = pneg %p168
      $region26: #{tpu_custom_call.1} parent=5 // pred_check_branch
        %171 = sbr.rel (%p169) target = $region28
      $region27: #{tpu_custom_call.1} parent=5 // pred_region
        // Predicated region
        $region29: #{tpu_custom_call.1} parent=27 // pred_check
          %p172 = pneg %p47
        $region30: #{tpu_custom_call.1} parent=27 // pred_check_branch
          %174 = sbr.rel (%p172) target = $region32
        $region31: #{tpu_custom_call.1} parent=27 // pred_region
          %p175 = scmp.lt.s32.totalorder %s20, 1
          %s176 = scalar_select %p175, %s20, 1
          %p177 = scmp.lt.s32.totalorder %s21, 1
          %s178 = scalar_select %p177, %s21, 1
          %s179 = smul.addr %s178, 30
          %s180 = smul.addr %s176, 60
          %s181 = sadd.s32 %s179, %s180
          %s182 = smul.addr %s181, 8
          %s183 = scalar_lea.vmem %s0, %s182
        $region32: #{tpu_custom_call.1} parent=27 // pred_fallthru
          _
      $region28: #{tpu_custom_call.1} parent=5 // pred_fallthru
        _
      %p184 = scmp.le.s32.totalorder 1, %s13
      %p185 = scmp.lt.s32.totalorder %s13, 5
      %p186 = pnand %p184, %p185
      %p187 = pneg %p186
      // Predicated region
      $region33: #{tpu_custom_call.1} parent=5 // pred_check
        _
      $region34: #{tpu_custom_call.1} parent=5 // pred_check_branch
        %189 = sbr.rel (%p186) target = $region36
      $region35: #{tpu_custom_call.1} parent=5 // pred_region
        %s190 = ssub.s32 %s13, 1
        %p191 = scmp.lt.s32.totalorder %s22, 1
        %s192 = scalar_select %p191, %s22, 1
        %p193 = scmp.lt.s32.totalorder %s23, 1
        %s194 = scalar_select %p193, %s23, 1
        %s195 = smul.addr %s194, 30
        %s196 = smul.addr %s192, 60
        %s197 = sadd.s32 %s195, %s196
        %s198 = smul.addr %s197, 8
        %s199 = scalar_lea.vmem %s0, %s198
        %p200 = pneg %p53
        %p201 = pneg %p50
        %p202 = pneg %p74
        %p203 = pneg %p71
        %p204 = pneg %p95
        %p205 = pneg %p92
        %p206 = pneg %p116
        %p207 = pneg %p113
        %p208 = pneg %p144
        %p209 = pneg %p141
        %s210 = sand.u32 %s131, 1
        %s211 = scalar_lea.sflag [#allocation3], %s210
        %s212 = sand.u32 %s131, 1
        %s213 = smul.addr %s212, 128
        %s214 = scalar_lea.vmem [#allocation2], %s213
        %p215 = scmp.lt.s32.totalorder %s22, 1
        %s216 = scalar_select %p215, %s22, 1
        %p217 = scmp.lt.s32.totalorder %s23, 1
        %s218 = scalar_select %p217, %s23, 1
        %s219 = smul.addr %s218, 30
        %s220 = smul.addr %s216, 60
        %s221 = sadd.s32 %s219, %s220
        %s222 = smul.addr %s221, 8
        %s223 = scalar_lea.vmem %s0, %s222
        %v224 = vld [vmem:[%s1] sm:$0xff]
        %v225 = vld [vmem:[%s1 + $0x8] sm:$0x1]
        %v226 = vld [vmem:[%s223] sm:$0xff]
        %v227 = vld [vmem:[%s223 + $0x8] sm:$0xff]
        %v228 = vld [vmem:[%s223 + $0x18] sm:$0xff]
        %v229 = vld [vmem:[%s223 + $0x20] sm:$0xff]
        %v230 = vld [vmem:[%s223 + $0x30] sm:$0xff]
        %v231 = vld [vmem:[%s223 + $0x38] sm:$0xff]
        %v232 = vld [vmem:[%s223 + $0x48] sm:$0xff]
        %v233 = vld [vmem:[%s223 + $0x50] sm:$0xff]
        %v234 = vld [vmem:[%s223 + $0x60] sm:$0xff]
        %v235 = vld [vmem:[%s223 + $0x68] sm:$0xff]
        %v236 = vld [vmem:[%s223 + $0x78] sm:$0xff]
        %v237 = vld [vmem:[%s223 + $0x80] sm:$0xff]
        %v238 = vld [vmem:[%s223 + $0x90] sm:$0xff]
        %v239 = vld [vmem:[%s223 + $0x98] sm:$0xff]
        %v240 = vld [vmem:[%s223 + $0xa8] sm:$0xff]
        %v241 = vld [vmem:[%s223 + $0xb0] sm:$0xff]
        %v242 = vlaneseq
        %v243 = vshrl.u32 %v242, 7
        %v244 = vsub.s32 0, %v243
        %v245 = vrot.slane %v224, %v244
        %v246 = vmul.f32 %v226, %v245
        %v247 = vmul.f32 %v227, %v245
        %v248 = vmul.f32 %v228, %v245
        %v249 = vmul.f32 %v229, %v245
        %v250 = vmul.f32 %v230, %v245
        %v251 = vmul.f32 %v231, %v245
        %v252 = vmul.f32 %v232, %v245
        %v253 = vmul.f32 %v233, %v245
        %v254 = vmul.f32 %v234, %v245
        %v255 = vmul.f32 %v235, %v245
        %v256 = vmul.f32 %v236, %v245
        %v257 = vmul.f32 %v237, %v245
        %v258 = vmul.f32 %v238, %v245
        %v259 = vmul.f32 %v239, %v245
        %v260 = vmul.f32 %v240, %v245
        %v261 = vmul.f32 %v241, %v245
        %v262 = vld [vmem:[%s223 + $0x1] sm:$0xff]
        %v263 = vld [vmem:[%s223 + $0x9] sm:$0xff]
        %v264 = vld [vmem:[%s223 + $0x19] sm:$0xff]
        %v265 = vld [vmem:[%s223 + $0x21] sm:$0xff]
        %v266 = vld [vmem:[%s223 + $0x31] sm:$0xff]
        %v267 = vld [vmem:[%s223 + $0x39] sm:$0xff]
        %v268 = vld [vmem:[%s223 + $0x49] sm:$0xff]
        %v269 = vld [vmem:[%s223 + $0x51] sm:$0xff]
        %v270 = vld [vmem:[%s223 + $0x61] sm:$0xff]
        %v271 = vld [vmem:[%s223 + $0x69] sm:$0xff]
        %v272 = vld [vmem:[%s223 + $0x79] sm:$0xff]
        %v273 = vld [vmem:[%s223 + $0x81] sm:$0xff]
        %v274 = vld [vmem:[%s223 + $0x91] sm:$0xff]
        %v275 = vld [vmem:[%s223 + $0x99] sm:$0xff]
        %v276 = vld [vmem:[%s223 + $0xa9] sm:$0xff]
        %v277 = vld [vmem:[%s223 + $0xb1] sm:$0xff]
        %v278 = vlaneseq
        %v279 = vshrl.u32 %v278, 7
        %v280 = vsub.s32 1, %v279
        %v281 = vrot.slane %v224, %v280
        %v282 = vmul.f32 %v262, %v281
        %v283 = vmul.f32 %v263, %v281
        %v284 = vmul.f32 %v264, %v281
        %v285 = vmul.f32 %v265, %v281
        %v286 = vmul.f32 %v266, %v281
        %v287 = vmul.f32 %v267, %v281
        %v288 = vmul.f32 %v268, %v281
        %v289 = vmul.f32 %v269, %v281
        %v290 = vmul.f32 %v270, %v281
        %v291 = vmul.f32 %v271, %v281
        %v292 = vmul.f32 %v272, %v281
        %v293 = vmul.f32 %v273, %v281
        %v294 = vmul.f32 %v274, %v281
        %v295 = vmul.f32 %v275, %v281
        %v296 = vmul.f32 %v276, %v281
        %v297 = vmul.f32 %v277, %v281
        %v298 = vadd.f32 %v246, %v282
        %v299 = vadd.f32 %v247, %v283
        %v300 = vadd.f32 %v248, %v284
        %v301 = vadd.f32 %v249, %v285
        %v302 = vadd.f32 %v250, %v286
        %v303 = vadd.f32 %v251, %v287
        %v304 = vadd.f32 %v252, %v288
        %v305 = vadd.f32 %v253, %v289
        %v306 = vadd.f32 %v254, %v290
        %v307 = vadd.f32 %v255, %v291
        %v308 = vadd.f32 %v256, %v292
        %v309 = vadd.f32 %v257, %v293
        %v310 = vadd.f32 %v258, %v294
        %v311 = vadd.f32 %v259, %v295
        %v312 = vadd.f32 %v260, %v296
        %v313 = vadd.f32 %v261, %v297
        %v314 = vld [vmem:[%s223 + $0x2] sm:$0xff]
        %v315 = vld [vmem:[%s223 + $0xa] sm:$0xff]
        %v316 = vld [vmem:[%s223 + $0x1a] sm:$0xff]
        %v317 = vld [vmem:[%s223 + $0x22] sm:$0xff]
        %v318 = vld [vmem:[%s223 + $0x32] sm:$0xff]
        %v319 = vld [vmem:[%s223 + $0x3a] sm:$0xff]
        %v320 = vld [vmem:[%s223 + $0x4a] sm:$0xff]
        %v321 = vld [vmem:[%s223 + $0x52] sm:$0xff]
        %v322 = vld [vmem:[%s223 + $0x62] sm:$0xff]
        %v323 = vld [vmem:[%s223 + $0x6a] sm:$0xff]
        %v324 = vld [vmem:[%s223 + $0x7a] sm:$0xff]
        %v325 = vld [vmem:[%s223 + $0x82] sm:$0xff]
        %v326 = vld [vmem:[%s223 + $0x92] sm:$0xff]
        %v327 = vld [vmem:[%s223 + $0x9a] sm:$0xff]
        %v328 = vld [vmem:[%s223 + $0xaa] sm:$0xff]
        %v329 = vld [vmem:[%s223 + $0xb2] sm:$0xff]
        %v330 = vlaneseq
        %v331 = vshrl.u32 %v330, 7
        %v332 = vsub.s32 2, %v331
        %v333 = vrot.slane %v224, %v332
        %v334 = vmul.f32 %v314, %v333
        %v335 = vmul.f32 %v315, %v333
        %v336 = vmul.f32 %v316, %v333
        %v337 = vmul.f32 %v317, %v333
        %v338 = vmul.f32 %v318, %v333
        %v339 = vmul.f32 %v319, %v333
        %v340 = vmul.f32 %v320, %v333
        %v341 = vmul.f32 %v321, %v333
        %v342 = vmul.f32 %v322, %v333
        %v343 = vmul.f32 %v323, %v333
        %v344 = vmul.f32 %v324, %v333
        %v345 = vmul.f32 %v325, %v333
        %v346 = vmul.f32 %v326, %v333
        %v347 = vmul.f32 %v327, %v333
        %v348 = vmul.f32 %v328, %v333
        %v349 = vmul.f32 %v329, %v333
        %v350 = vadd.f32 %v298, %v334
        %v351 = vadd.f32 %v299, %v335
        %v352 = vadd.f32 %v300, %v336
        %v353 = vadd.f32 %v301, %v337
        %v354 = vadd.f32 %v302, %v338
        %v355 = vadd.f32 %v303, %v339
        %v356 = vadd.f32 %v304, %v340
        %v357 = vadd.f32 %v305, %v341
        %v358 = vadd.f32 %v306, %v342
        %v359 = vadd.f32 %v307, %v343
        %v360 = vadd.f32 %v308, %v344
        %v361 = vadd.f32 %v309, %v345
        %v362 = vadd.f32 %v310, %v346
        %v363 = vadd.f32 %v311, %v347
        %v364 = vadd.f32 %v312, %v348
        %v365 = vadd.f32 %v313, %v349
        %s366 = scalar_lea.vmem %s223, 24
        %v367 = vld [vmem:[%s366] sm:$0xff]
        %v368 = vld [vmem:[%s366 + $0x8] sm:$0xff]
        %v369 = vld [vmem:[%s366 + $0x18] sm:$0xff]
        %v370 = vld [vmem:[%s366 + $0x20] sm:$0xff]
        %v371 = vld [vmem:[%s366 + $0x30] sm:$0xff]
        %v372 = vld [vmem:[%s366 + $0x38] sm:$0xff]
        %v373 = vld [vmem:[%s366 + $0x48] sm:$0xff]
        %v374 = vld [vmem:[%s366 + $0x50] sm:$0xff]
        %v375 = vld [vmem:[%s366 + $0x60] sm:$0xff]
        %v376 = vld [vmem:[%s366 + $0x68] sm:$0xff]
        %v377 = vld [vmem:[%s366 + $0x78] sm:$0xff]
        %v378 = vld [vmem:[%s366 + $0x80] sm:$0xff]
        %v379 = vld [vmem:[%s366 + $0x90] sm:$0xff]
        %v380 = vld [vmem:[%s366 + $0x98] sm:$0xff]
        %v381 = vld [vmem:[%s366 + $0xa8] sm:$0xff]
        %v382 = vld [vmem:[%s366 + $0xb0] sm:$0xff]
        %v383 = vlaneseq
        %v384 = vshrl.u32 %v383, 7
        %v385 = vsub.s32 3, %v384
        %v386 = vrot.slane %v224, %v385
        %v387 = vmul.f32 %v367, %v386
        %v388 = vmul.f32 %v368, %v386
        %v389 = vmul.f32 %v369, %v386
        %v390 = vmul.f32 %v370, %v386
        %v391 = vmul.f32 %v371, %v386
        %v392 = vmul.f32 %v372, %v386
        %v393 = vmul.f32 %v373, %v386
        %v394 = vmul.f32 %v374, %v386
        %v395 = vmul.f32 %v375, %v386
        %v396 = vmul.f32 %v376, %v386
        %v397 = vmul.f32 %v377, %v386
        %v398 = vmul.f32 %v378, %v386
        %v399 = vmul.f32 %v379, %v386
        %v400 = vmul.f32 %v380, %v386
        %v401 = vmul.f32 %v381, %v386
        %v402 = vmul.f32 %v382, %v386
        %v403 = vadd.f32 %v350, %v387
        %v404 = vadd.f32 %v351, %v388
        %v405 = vadd.f32 %v352, %v389
        %v406 = vadd.f32 %v353, %v390
        %v407 = vadd.f32 %v354, %v391
        %v408 = vadd.f32 %v355, %v392
        %v409 = vadd.f32 %v356, %v393
        %v410 = vadd.f32 %v357, %v394
        %v411 = vadd.f32 %v358, %v395
        %v412 = vadd.f32 %v359, %v396
        %v413 = vadd.f32 %v360, %v397
        %v414 = vadd.f32 %v361, %v398
        %v415 = vadd.f32 %v362, %v399
        %v416 = vadd.f32 %v363, %v400
        %v417 = vadd.f32 %v364, %v401
        %v418 = vadd.f32 %v365, %v402
        %v419 = vld [vmem:[%s366 + $0x1] sm:$0xff]
        %v420 = vld [vmem:[%s366 + $0x9] sm:$0xff]
        %v421 = vld [vmem:[%s366 + $0x19] sm:$0xff]
        %v422 = vld [vmem:[%s366 + $0x21] sm:$0xff]
        %v423 = vld [vmem:[%s366 + $0x31] sm:$0xff]
        %v424 = vld [vmem:[%s366 + $0x39] sm:$0xff]
        %v425 = vld [vmem:[%s366 + $0x49] sm:$0xff]
        %v426 = vld [vmem:[%s366 + $0x51] sm:$0xff]
        %v427 = vld [vmem:[%s366 + $0x61] sm:$0xff]
        %v428 = vld [vmem:[%s366 + $0x69] sm:$0xff]
        %v429 = vld [vmem:[%s366 + $0x79] sm:$0xff]
        %v430 = vld [vmem:[%s366 + $0x81] sm:$0xff]
        %v431 = vld [vmem:[%s366 + $0x91] sm:$0xff]
        %v432 = vld [vmem:[%s366 + $0x99] sm:$0xff]
        %v433 = vld [vmem:[%s366 + $0xa9] sm:$0xff]
        %v434 = vld [vmem:[%s366 + $0xb1] sm:$0xff]
        %v435 = vlaneseq
        %v436 = vshrl.u32 %v435, 7
        %v437 = vsub.s32 4, %v436
        %v438 = vrot.slane %v224, %v437
        %v439 = vmul.f32 %v419, %v438
        %v440 = vmul.f32 %v420, %v438
        %v441 = vmul.f32 %v421, %v438
        %v442 = vmul.f32 %v422, %v438
        %v443 = vmul.f32 %v423, %v438
        %v444 = vmul.f32 %v424, %v438
        %v445 = vmul.f32 %v425, %v438
        %v446 = vmul.f32 %v426, %v438
        %v447 = vmul.f32 %v427, %v438
        %v448 = vmul.f32 %v428, %v438
        %v449 = vmul.f32 %v429, %v438
        %v450 = vmul.f32 %v430, %v438
        %v451 = vmul.f32 %v431, %v438
        %v452 = vmul.f32 %v432, %v438
        %v453 = vmul.f32 %v433, %v438
        %v454 = vmul.f32 %v434, %v438
        %v455 = vadd.f32 %v403, %v439
        %v456 = vadd.f32 %v404, %v440
        %v457 = vadd.f32 %v405, %v441
        %v458 = vadd.f32 %v406, %v442
        %v459 = vadd.f32 %v407, %v443
        %v460 = vadd.f32 %v408, %v444
        %v461 = vadd.f32 %v409, %v445
        %v462 = vadd.f32 %v410, %v446
        %v463 = vadd.f32 %v411, %v447
        %v464 = vadd.f32 %v412, %v448
        %v465 = vadd.f32 %v413, %v449
        %v466 = vadd.f32 %v414, %v450
        %v467 = vadd.f32 %v415, %v451
        %v468 = vadd.f32 %v416, %v452
        %v469 = vadd.f32 %v417, %v453
        %v470 = vadd.f32 %v418, %v454
        %v471 = vld [vmem:[%s366 + $0x2] sm:$0xff]
        %v472 = vld [vmem:[%s366 + $0xa] sm:$0xff]
        %v473 = vld [vmem:[%s366 + $0x1a] sm:$0xff]
        %v474 = vld [vmem:[%s366 + $0x22] sm:$0xff]
        %v475 = vld [vmem:[%s366 + $0x32] sm:$0xff]
        %v476 = vld [vmem:[%s366 + $0x3a] sm:$0xff]
        %v477 = vld [vmem:[%s366 + $0x4a] sm:$0xff]
        %v478 = vld [vmem:[%s366 + $0x52] sm:$0xff]
        %v479 = vld [vmem:[%s366 + $0x62] sm:$0xff]
        %v480 = vld [vmem:[%s366 + $0x6a] sm:$0xff]
        %v481 = vld [vmem:[%s366 + $0x7a] sm:$0xff]
        %v482 = vld [vmem:[%s366 + $0x82] sm:$0xff]
        %v483 = vld [vmem:[%s366 + $0x92] sm:$0xff]
        %v484 = vld [vmem:[%s366 + $0x9a] sm:$0xff]
        %v485 = vld [vmem:[%s366 + $0xaa] sm:$0xff]
        %v486 = vld [vmem:[%s366 + $0xb2] sm:$0xff]
        %v487 = vlaneseq
        %v488 = vshrl.u32 %v487, 7
        %v489 = vsub.s32 5, %v488
        %v490 = vrot.slane %v224, %v489
        %v491 = vmul.f32 %v471, %v490
        %v492 = vmul.f32 %v472, %v490
        %v493 = vmul.f32 %v473, %v490
        %v494 = vmul.f32 %v474, %v490
        %v495 = vmul.f32 %v475, %v490
        %v496 = vmul.f32 %v476, %v490
        %v497 = vmul.f32 %v477, %v490
        %v498 = vmul.f32 %v478, %v490
        %v499 = vmul.f32 %v479, %v490
        %v500 = vmul.f32 %v480, %v490
        %v501 = vmul.f32 %v481, %v490
        %v502 = vmul.f32 %v482, %v490
        %v503 = vmul.f32 %v483, %v490
        %v504 = vmul.f32 %v484, %v490
        %v505 = vmul.f32 %v485, %v490
        %v506 = vmul.f32 %v486, %v490
        %v507 = vadd.f32 %v455, %v491
        %v508 = vadd.f32 %v456, %v492
        %v509 = vadd.f32 %v457, %v493
        %v510 = vadd.f32 %v458, %v494
        %v511 = vadd.f32 %v459, %v495
        %v512 = vadd.f32 %v460, %v496
        %v513 = vadd.f32 %v461, %v497
        %v514 = vadd.f32 %v462, %v498
        %v515 = vadd.f32 %v463, %v499
        %v516 = vadd.f32 %v464, %v500
        %v517 = vadd.f32 %v465, %v501
        %v518 = vadd.f32 %v466, %v502
        %v519 = vadd.f32 %v467, %v503
        %v520 = vadd.f32 %v468, %v504
        %v521 = vadd.f32 %v469, %v505
        %v522 = vadd.f32 %v470, %v506
        %s523 = scalar_lea.vmem %s223, 48
        %v524 = vld [vmem:[%s523] sm:$0xff]
        %v525 = vld [vmem:[%s523 + $0x8] sm:$0xff]
        %v526 = vld [vmem:[%s523 + $0x18] sm:$0xff]
        %v527 = vld [vmem:[%s523 + $0x20] sm:$0xff]
        %v528 = vld [vmem:[%s523 + $0x30] sm:$0xff]
        %v529 = vld [vmem:[%s523 + $0x38] sm:$0xff]
        %v530 = vld [vmem:[%s523 + $0x48] sm:$0xff]
        %v531 = vld [vmem:[%s523 + $0x50] sm:$0xff]
        %v532 = vld [vmem:[%s523 + $0x60] sm:$0xff]
        %v533 = vld [vmem:[%s523 + $0x68] sm:$0xff]
        %v534 = vld [vmem:[%s523 + $0x78] sm:$0xff]
        %v535 = vld [vmem:[%s523 + $0x80] sm:$0xff]
        %v536 = vld [vmem:[%s523 + $0x90] sm:$0xff]
        %v537 = vld [vmem:[%s523 + $0x98] sm:$0xff]
        %v538 = vld [vmem:[%s523 + $0xa8] sm:$0xff]
        %v539 = vld [vmem:[%s523 + $0xb0] sm:$0xff]
        %v540 = vlaneseq
        %v541 = vshrl.u32 %v540, 7
        %v542 = vsub.s32 6, %v541
        %v543 = vrot.slane %v224, %v542
        %v544 = vmul.f32 %v524, %v543
        %v545 = vmul.f32 %v525, %v543
        %v546 = vmul.f32 %v526, %v543
        %v547 = vmul.f32 %v527, %v543
        %v548 = vmul.f32 %v528, %v543
        %v549 = vmul.f32 %v529, %v543
        %v550 = vmul.f32 %v530, %v543
        %v551 = vmul.f32 %v531, %v543
        %v552 = vmul.f32 %v532, %v543
        %v553 = vmul.f32 %v533, %v543
        %v554 = vmul.f32 %v534, %v543
        %v555 = vmul.f32 %v535, %v543
        %v556 = vmul.f32 %v536, %v543
        %v557 = vmul.f32 %v537, %v543
        %v558 = vmul.f32 %v538, %v543
        %v559 = vmul.f32 %v539, %v543
        %v560 = vadd.f32 %v507, %v544
        %v561 = vadd.f32 %v508, %v545
        %v562 = vadd.f32 %v509, %v546
        %v563 = vadd.f32 %v510, %v547
        %v564 = vadd.f32 %v511, %v548
        %v565 = vadd.f32 %v512, %v549
        %v566 = vadd.f32 %v513, %v550
        %v567 = vadd.f32 %v514, %v551
        %v568 = vadd.f32 %v515, %v552
        %v569 = vadd.f32 %v516, %v553
        %v570 = vadd.f32 %v517, %v554
        %v571 = vadd.f32 %v518, %v555
        %v572 = vadd.f32 %v519, %v556
        %v573 = vadd.f32 %v520, %v557
        %v574 = vadd.f32 %v521, %v558
        %v575 = vadd.f32 %v522, %v559
        %v576 = vld [vmem:[%s523 + $0x1] sm:$0xff]
        %v577 = vld [vmem:[%s523 + $0x9] sm:$0xff]
        %v578 = vld [vmem:[%s523 + $0x19] sm:$0xff]
        %v579 = vld [vmem:[%s523 + $0x21] sm:$0xff]
        %v580 = vld [vmem:[%s523 + $0x31] sm:$0xff]
        %v581 = vld [vmem:[%s523 + $0x39] sm:$0xff]
        %v582 = vld [vmem:[%s523 + $0x49] sm:$0xff]
        %v583 = vld [vmem:[%s523 + $0x51] sm:$0xff]
        %v584 = vld [vmem:[%s523 + $0x61] sm:$0xff]
        %v585 = vld [vmem:[%s523 + $0x69] sm:$0xff]
        %v586 = vld [vmem:[%s523 + $0x79] sm:$0xff]
        %v587 = vld [vmem:[%s523 + $0x81] sm:$0xff]
        %v588 = vld [vmem:[%s523 + $0x91] sm:$0xff]
        %v589 = vld [vmem:[%s523 + $0x99] sm:$0xff]
        %v590 = vld [vmem:[%s523 + $0xa9] sm:$0xff]
        %v591 = vld [vmem:[%s523 + $0xb1] sm:$0xff]
        %v592 = vlaneseq
        %v593 = vshrl.u32 %v592, 7
        %v594 = vsub.s32 7, %v593
        %v595 = vrot.slane %v224, %v594
        %v596 = vmul.f32 %v576, %v595
        %v597 = vmul.f32 %v577, %v595
        %v598 = vmul.f32 %v578, %v595
        %v599 = vmul.f32 %v579, %v595
        %v600 = vmul.f32 %v580, %v595
        %v601 = vmul.f32 %v581, %v595
        %v602 = vmul.f32 %v582, %v595
        %v603 = vmul.f32 %v583, %v595
        %v604 = vmul.f32 %v584, %v595
        %v605 = vmul.f32 %v585, %v595
        %v606 = vmul.f32 %v586, %v595
        %v607 = vmul.f32 %v587, %v595
        %v608 = vmul.f32 %v588, %v595
        %v609 = vmul.f32 %v589, %v595
        %v610 = vmul.f32 %v590, %v595
        %v611 = vmul.f32 %v591, %v595
        %v612 = vadd.f32 %v560, %v596
        %v613 = vadd.f32 %v561, %v597
        %v614 = vadd.f32 %v562, %v598
        %v615 = vadd.f32 %v563, %v599
        %v616 = vadd.f32 %v564, %v600
        %v617 = vadd.f32 %v565, %v601
        %v618 = vadd.f32 %v566, %v602
        %v619 = vadd.f32 %v567, %v603
        %v620 = vadd.f32 %v568, %v604
        %v621 = vadd.f32 %v569, %v605
        %v622 = vadd.f32 %v570, %v606
        %v623 = vadd.f32 %v571, %v607
        %v624 = vadd.f32 %v572, %v608
        %v625 = vadd.f32 %v573, %v609
        %v626 = vadd.f32 %v574, %v610
        %v627 = vadd.f32 %v575, %v611
        %v628 = vld [vmem:[%s523 + $0x2] sm:$0xff]
        %v629 = vld [vmem:[%s523 + $0xa] sm:$0xff]
        %v630 = vld [vmem:[%s523 + $0x1a] sm:$0xff]
        %v631 = vld [vmem:[%s523 + $0x22] sm:$0xff]
        %v632 = vld [vmem:[%s523 + $0x32] sm:$0xff]
        %v633 = vld [vmem:[%s523 + $0x3a] sm:$0xff]
        %v634 = vld [vmem:[%s523 + $0x4a] sm:$0xff]
        %v635 = vld [vmem:[%s523 + $0x52] sm:$0xff]
        %v636 = vld [vmem:[%s523 + $0x62] sm:$0xff]
        %v637 = vld [vmem:[%s523 + $0x6a] sm:$0xff]
        %v638 = vld [vmem:[%s523 + $0x7a] sm:$0xff]
        %v639 = vld [vmem:[%s523 + $0x82] sm:$0xff]
        %v640 = vld [vmem:[%s523 + $0x92] sm:$0xff]
        %v641 = vld [vmem:[%s523 + $0x9a] sm:$0xff]
        %v642 = vld [vmem:[%s523 + $0xaa] sm:$0xff]
        %v643 = vld [vmem:[%s523 + $0xb2] sm:$0xff]
        %v644 = vlaneseq
        %v645 = vshrl.u32 %v644, 7
        %v646 = vsub.s32 0, %v645
        %v647 = vrot.slane %v225, %v646
        %v648 = vmul.f32 %v628, %v647
        %v649 = vmul.f32 %v629, %v647
        %v650 = vmul.f32 %v630, %v647
        %v651 = vmul.f32 %v631, %v647
        %v652 = vmul.f32 %v632, %v647
        %v653 = vmul.f32 %v633, %v647
        %v654 = vmul.f32 %v634, %v647
        %v655 = vmul.f32 %v635, %v647
        %v656 = vmul.f32 %v636, %v647
        %v657 = vmul.f32 %v637, %v647
        %v658 = vmul.f32 %v638, %v647
        %v659 = vmul.f32 %v639, %v647
        %v660 = vmul.f32 %v640, %v647
        %v661 = vmul.f32 %v641, %v647
        %v662 = vmul.f32 %v642, %v647
        %v663 = vmul.f32 %v643, %v647
        %v664 = vadd.f32 %v612, %v648
        %v665 = vadd.f32 %v613, %v649
        %v666 = vadd.f32 %v614, %v650
        %v667 = vadd.f32 %v615, %v651
        %v668 = vadd.f32 %v616, %v652
        %v669 = vadd.f32 %v617, %v653
        %v670 = vadd.f32 %v618, %v654
        %v671 = vadd.f32 %v619, %v655
        %v672 = vadd.f32 %v620, %v656
        %v673 = vadd.f32 %v621, %v657
        %v674 = vadd.f32 %v622, %v658
        %v675 = vadd.f32 %v623, %v659
        %v676 = vadd.f32 %v624, %v660
        %v677 = vadd.f32 %v625, %v661
        %v678 = vadd.f32 %v626, %v662
        %v679 = vadd.f32 %v627, %v663
        %v680 = vld [vmem:[%s2] sm:$0xf]
        %v681 = vld [vmem:[%s3] sm:$0x1]
        %v683 = vlaneseq
        %v684 = vshrl.u32 %v683, 7
        %v685 = vsub.s32 0, %v684
        %v686 = vrot.slane %v681, %v685
        %vm688 = vcmask 31744
        %v690 = vsel %vm688, %v664, 0
        %v693 = vsel %vm688, %v665, 0
        %v696 = vsel %vm688, %v666, 0
        %v699 = vsel %vm688, %v667, 0
        %v702 = vsel %vm688, %v668, 0
        %v705 = vsel %vm688, %v669, 0
        %v708 = vsel %vm688, %v670, 0
        %v711 = vsel %vm688, %v671, 0
        %v714 = vsel %vm688, %v672, 0
        %v717 = vsel %vm688, %v673, 0
        %v720 = vsel %vm688, %v674, 0
        %v723 = vsel %vm688, %v675, 0
        %v726 = vsel %vm688, %v676, 0
        %v729 = vsel %vm688, %v677, 0
        %v732 = vsel %vm688, %v678, 0
        %v735 = vsel %vm688, %v679, 0
        %vm737 = vcmask 1043456
        %v739 = vsel %vm737, %v680, 0
        %741 = vmatprep.subr.mxu0 0.0
        %742 = vmatpush1.msra.mxu0 0.0
        %743 = vmatprep.subr.mxu0 0.0
        %744 = vmatpush1.msra.mxu0 0.0
        %745 = vmatprep.subr.mxu0 0.0
        %746 = vmatpush1.msra.mxu0 0.0
        %747 = vmatprep.subr.mxu0 0.0
        %748 = vmatpush1.msra.mxu0 0.0
        %749 = vmatprep.subr.mxu0 0.0
        %750 = vmatpush1.msra.mxu0 0.0
        %751 = vmatprep.subr.mxu0 0.0
        %752 = vmatpush1.msra.mxu0 0.0
        %753 = vmatprep.subr.mxu0 0.0
        %754 = vmatpush1.msra.mxu0 0.0
        %755 = vmatprep.subr.mxu0 0.0
        %756 = vmatpush1.msra.mxu0 0.0
        %757 = vmatprep.subr.mxu0 0.0
        %758 = vmatpush1.msra.mxu0 0.0
        %759 = vmatprep.subr.mxu0 0.0
        %760 = vmatpush1.msra.mxu0 0.0
        %761 = vmatprep.subr.mxu0 0.0
        %762 = vmatpush1.msra.mxu0 0.0
        %763 = vmatprep.subr.mxu0 0.0
        %764 = vmatpush1.msra.mxu0 0.0
        %765 = vmatprep.subr.mxu0 0.0
        %766 = vmatpush1.msra.mxu0 0.0
        %767 = vmatprep.subr.mxu0 0.0
        %768 = vmatpush1.msra.mxu0 0.0
        %769 = vmatprep.subr.mxu0 0.0
        %770 = vmatpush1.msra.mxu0 0.0
        %771 = vmatprep.subr.mxu0 0.0
        %772 = vmatpush1.msra.mxu0 %v739
        %773 = vmatprep.subr.mxu0 0.0
        %774 = vmatpush2.msra.mxu0 0.0
        %775 = vmatprep.subr.mxu0 0.0
        %776 = vmatpush2.msra.mxu0 0.0
        %777 = vmatprep.subr.mxu0 0.0
        %778 = vmatpush2.msra.mxu0 0.0
        %779 = vmatprep.subr.mxu0 0.0
        %780 = vmatpush2.msra.mxu0 0.0
        %781 = vmatprep.subr.mxu0 0.0
        %782 = vmatpush2.msra.mxu0 0.0
        %783 = vmatprep.subr.mxu0 0.0
        %784 = vmatpush2.msra.mxu0 0.0
        %785 = vmatprep.subr.mxu0 0.0
        %786 = vmatpush2.msra.mxu0 0.0
        %787 = vmatprep.subr.mxu0 0.0
        %788 = vmatpush2.msra.mxu0 0.0
        %789 = vmatprep.subr.mxu0 0.0
        %790 = vmatpush2.msra.mxu0 0.0
        %791 = vmatprep.subr.mxu0 0.0
        %792 = vmatpush2.msra.mxu0 0.0
        %793 = vmatprep.subr.mxu0 0.0
        %794 = vmatpush2.msra.mxu0 0.0
        %795 = vmatprep.subr.mxu0 0.0
        %796 = vmatpush2.msra.mxu0 0.0
        %797 = vmatprep.subr.mxu0 0.0
        %798 = vmatpush2.msra.mxu0 0.0
        %799 = vmatprep.subr.mxu0 0.0
        %800 = vmatpush2.msra.mxu0 0.0
        %801 = vmatprep.subr.mxu0 0.0
        %802 = vmatpush2.msra.mxu0 0.0
        %803 = vmatprep.subr.mxu0 0.0
        %804 = vmatpush2.msra.mxu0 0.0
        %805 = vmatprep.mubr.f32.mxu0 0.0
        %806 = vmatmul.mubr.f32.gmra.mxu0 %v690
        %v807 = vpop.f32.mrf.mxu0
        %v808 = vadd.f32 %v686, %v807
        %v809 = vpop.f32.mrf.mxu0
        %810 = vmatprep.mubr.f32.mxu0 0.0
        %811 = vmatmul.mubr.f32.gmra.mxu0 %v693
        %v812 = vpop.f32.mrf.mxu0
        %v813 = vadd.f32 %v686, %v812
        %v814 = vpop.f32.mrf.mxu0
        %815 = vmatprep.mubr.f32.mxu0 0.0
        %816 = vmatmul.mubr.f32.gmra.mxu0 %v696
        %v817 = vpop.f32.mrf.mxu0
        %v818 = vadd.f32 %v686, %v817
        %v819 = vpop.f32.mrf.mxu0
        %820 = vmatprep.mubr.f32.mxu0 0.0
        %821 = vmatmul.mubr.f32.gmra.mxu0 %v699
        %v822 = vpop.f32.mrf.mxu0
        %v823 = vadd.f32 %v686, %v822
        %v824 = vpop.f32.mrf.mxu0
        %825 = vmatprep.mubr.f32.mxu0 0.0
        %826 = vmatmul.mubr.f32.gmra.mxu0 %v702
        %v827 = vpop.f32.mrf.mxu0
        %v828 = vadd.f32 %v686, %v827
        %v829 = vpop.f32.mrf.mxu0
        %830 = vmatprep.mubr.f32.mxu0 0.0
        %831 = vmatmul.mubr.f32.gmra.mxu0 %v705
        %v832 = vpop.f32.mrf.mxu0
        %v833 = vadd.f32 %v686, %v832
        %v834 = vpop.f32.mrf.mxu0
        %835 = vmatprep.mubr.f32.mxu0 0.0
        %836 = vmatmul.mubr.f32.gmra.mxu0 %v708
        %v837 = vpop.f32.mrf.mxu0
        %v838 = vadd.f32 %v686, %v837
        %v839 = vpop.f32.mrf.mxu0
        %840 = vmatprep.mubr.f32.mxu0 0.0
        %841 = vmatmul.mubr.f32.gmra.mxu0 %v711
        %v842 = vpop.f32.mrf.mxu0
        %v843 = vadd.f32 %v686, %v842
        %v844 = vpop.f32.mrf.mxu0
        %845 = vmatprep.mubr.f32.mxu0 0.0
        %846 = vmatmul.mubr.f32.gmra.mxu0 %v714
        %v847 = vpop.f32.mrf.mxu0
        %v848 = vadd.f32 %v686, %v847
        %v849 = vpop.f32.mrf.mxu0
        %850 = vmatprep.mubr.f32.mxu0 0.0
        %851 = vmatmul.mubr.f32.gmra.mxu0 %v717
        %v852 = vpop.f32.mrf.mxu0
        %v853 = vadd.f32 %v686, %v852
        %v854 = vpop.f32.mrf.mxu0
        %855 = vmatprep.mubr.f32.mxu0 0.0
        %856 = vmatmul.mubr.f32.gmra.mxu0 %v720
        %v857 = vpop.f32.mrf.mxu0
        %v858 = vadd.f32 %v686, %v857
        %v859 = vpop.f32.mrf.mxu0
        %860 = vmatprep.mubr.f32.mxu0 0.0
        %861 = vmatmul.mubr.f32.gmra.mxu0 %v723
        %v862 = vpop.f32.mrf.mxu0
        %v863 = vadd.f32 %v686, %v862
        %v864 = vpop.f32.mrf.mxu0
        %865 = vmatprep.mubr.f32.mxu0 0.0
        %866 = vmatmul.mubr.f32.gmra.mxu0 %v726
        %v867 = vpop.f32.mrf.mxu0
        %v868 = vadd.f32 %v686, %v867
        %v869 = vpop.f32.mrf.mxu0
        %870 = vmatprep.mubr.f32.mxu0 0.0
        %871 = vmatmul.mubr.f32.gmra.mxu0 %v729
        %v872 = vpop.f32.mrf.mxu0
        %v873 = vadd.f32 %v686, %v872
        %v874 = vpop.f32.mrf.mxu0
        %875 = vmatprep.mubr.f32.mxu0 0.0
        %876 = vmatmul.mubr.f32.gmra.mxu0 %v732
        %v877 = vpop.f32.mrf.mxu0
        %v878 = vadd.f32 %v686, %v877
        %v879 = vpop.f32.mrf.mxu0
        %880 = vmatprep.mubr.f32.mxu0 0.0
        %881 = vmatmul.mubr.f32.gmra.mxu0 %v735
        %v882 = vpop.f32.mrf.mxu0
        %v883 = vadd.f32 %v686, %v882
        %v884 = vpop.f32.mrf.mxu0
        %885 = vdwg.mxu0
        %886 = vst [vmem:[%s214] sm:$0xff] %v808
        %887 = vst [vmem:[%s214 + $0x8] sm:$0xff] %v813
        %888 = vst [vmem:[%s214 + $0x10] sm:$0xff] %v818
        %889 = vst [vmem:[%s214 + $0x18] sm:$0xff] %v823
        %890 = vst [vmem:[%s214 + $0x20] sm:$0xff] %v828
        %891 = vst [vmem:[%s214 + $0x28] sm:$0xff] %v833
        %892 = vst [vmem:[%s214 + $0x30] sm:$0xff] %v838
        %893 = vst [vmem:[%s214 + $0x38] sm:$0xff] %v843
        %894 = vst [vmem:[%s214 + $0x40] sm:$0xff] %v848
        %895 = vst [vmem:[%s214 + $0x48] sm:$0xff] %v853
        %896 = vst [vmem:[%s214 + $0x50] sm:$0xff] %v858
        %897 = vst [vmem:[%s214 + $0x58] sm:$0xff] %v863
        %898 = vst [vmem:[%s214 + $0x60] sm:$0xff] %v868
        %899 = vst [vmem:[%s214 + $0x68] sm:$0xff] %v873
        %900 = vst [vmem:[%s214 + $0x70] sm:$0xff] %v878
        %901 = vst [vmem:[%s214 + $0x78] sm:$0xff] %v883
        %s902 = sand.u32 %s131, 1
        %s903 = scalar_lea.sflag [#allocation3], %s902
        %s904 = sand.u32 %s131, 1
        %s905 = smul.addr %s904, 128
        %s906 = scalar_lea.vmem [#allocation2], %s905
        // Predicated region
        $region37: #{tpu_custom_call.1} parent=35 // pred_check
          %p907 = pneg %p141
        $region38: #{tpu_custom_call.1} parent=35 // pred_check_branch
          %909 = sbr.rel (%p907) target = $region40
        $region39: #{tpu_custom_call.1} parent=35 // pred_region
          %s911 = ssub.s32 2048, 2048
          %912 = vsyncadd %s903, %s911
          %s913 = smul.addr %s23, 16
          %s914 = smul.addr %s22, 32
          %s915 = sadd.s32 %s913, %s914
          %s916 = smul.addr %s915, 128
          %s917 = scalar_lea.hbm %s4, %s916
          %s918 = sshll.u32 %s906, 4
          %s919 = int_to_ptr.vmem [resolvable:$true] %s918
          %924 = dma.vmem_to_hbm [thread:$0]  %s919, 2048, %s917, %s903, 128, 128, 8
        $region40: #{tpu_custom_call.1} parent=35 // pred_fallthru
          _
      $region36: #{tpu_custom_call.1} parent=5 // pred_fallthru
        _
      %p925 = scmp.le.s32.totalorder 2, %s13
      // Predicated region
      $region41: #{tpu_custom_call.1} parent=5 // pred_check
        %p926 = pneg %p925
      $region42: #{tpu_custom_call.1} parent=5 // pred_check_branch
        %928 = sbr.rel (%p926) target = $region44
      $region43: #{tpu_custom_call.1} parent=5 // pred_region
        %s929 = ssub.s32 %s13, 2
        // Predicated region
        $region45: #{tpu_custom_call.1} parent=43 // pred_check
          %p930 = pneg %p147
        $region46: #{tpu_custom_call.1} parent=43 // pred_check_branch
          %932 = sbr.rel (%p930) target = $region48
        $region47: #{tpu_custom_call.1} parent=43 // pred_region
          %s933 = sand.u32 %s132, 1
          %s934 = scalar_lea.sflag [#allocation3], %s933
          %s935 = sand.u32 %s132, 1
          %s936 = smul.addr %s935, 128
          %s937 = scalar_lea.vmem [#allocation2], %s936
          %938 = dma.done %s934, 2048
        $region48: #{tpu_custom_call.1} parent=43 // pred_fallthru
          _
      $region44: #{tpu_custom_call.1} parent=5 // pred_fallthru
        _
    $region6: #{tpu_custom_call.1} parent=1 // loop_footer
      %s17 = sadd.s32 1, %s13
    $region7: #{tpu_custom_call.1} parent=1 // loop_footer_branch
      %12 = sbr.rel target = $region3
    $region8: #{tpu_custom_call.1} parent=1 // loop_exit
      _
    %939 = vsyncpa [#allocation3], 1
    %s940 = scalar_lea.sflag [#allocation3], 1
    %941 = vsyncpa %s940, 1

</llo_original>
